<compile_context>
chip_gen: v5e
topology: v5e:2x2
jax: 0.10.0
libtpu: 0.0.40
codegen_flags: <defaults>
</compile_context>

<pallas_src>
import functools

import jax
import jax.numpy as jnp
from jax.experimental import pallas as pl
from jax.experimental.pallas import tpu as pltpu

_LANE = 128
_SUBLANE = 8
_MIB = 1024 * 1024
# Per-tile byte target for Path A (x tile + out tile, one buffer).  ~4 MiB
# keeps the ~0.35us per-grid-step overhead negligible vs. the DMA time and
# lands tm in the 2048-8192 range for embedding-sized K/N.
_TILE_BYTE_TARGET = 4 * _MIB


def _round_up(x, m):
    return ((x + m - 1) // m) * m


def _divisor_tiles(dim_padded, unit):
    """Multiples of `unit` that evenly divide `dim_padded` (ascending)."""
    tiles = []
    t = unit
    while t <= dim_padded:
        if dim_padded % t == 0:
            tiles.append(t)
        t += unit
    return tiles


def _tpu_generation_config():
    """Per-generation VMEM budget / limit cap and TensorCores per device."""
    kind = ""
    try:
        kind = jax.devices()[0].device_kind.lower()
    except Exception:
        pass
    if "v7" in kind or "7x" in kind:
        # v7x: 64 MiB VMEM per TensorCore, 2 TCs per chip (megacore).
        return {"budget": 40 * _MIB, "cap": 48 * _MIB, "num_tc": 2}
    if "v6" in kind or "lite" in kind or "v5e" in kind:
        # v5e / v6e: 128 MiB VMEM, single TensorCore.
        return {"budget": 96 * _MIB, "cap": 100 * _MIB, "num_tc": 1}
    if "v5" in kind or "v4" in kind:
        # v4 / v5p: 128 MiB VMEM, 2 TensorCores (megacore).
        return {"budget": 96 * _MIB, "cap": 100 * _MIB, "num_tc": 2}
    # Unknown device: size for the smallest (v7x-like) VMEM, assume one core.
    return {"budget": 40 * _MIB, "cap": 48 * _MIB, "num_tc": 1}


# ---------- Path A: weight resident in VMEM, 1-D grid over M -----------------

def _embed_kernel(x_ref, w_ref, o_ref):
    # Single reduction step (K untiled): write the result directly.
    # No accumulator scratch, no init/finalize -> saves a VMEM round-trip.
    o_ref[...] = jnp.dot(
        x_ref[...], w_ref[...], preferred_element_type=jnp.float32
    ).astype(o_ref.dtype)


@functools.partial(
    jax.jit,
    static_argnames=("tm", "out_dtype", "vmem_limit", "single_buffer_weight"),
)
def _embed_matmul(x2d, w, *, tm, out_dtype, vmem_limit, single_buffer_weight):
    M, K = x2d.shape
    K2, N = w.shape
    assert K == K2

    if single_buffer_weight:
        # Constant block index => the weight is DMA'd once and never changes;
        # a single VMEM buffer suffices (halves the weight's VMEM footprint,
        # important on v7x's 64 MiB/TC).
        w_spec = pl.BlockSpec(
            (K, N), lambda i: (0, 0), pipeline_mode=pl.Buffered(1)
        )
    else:
        w_spec = pl.BlockSpec((K, N), lambda i: (0, 0))

    flops = 2 * M * K * N
    bytes_accessed = (
        x2d.size * x2d.dtype.itemsize
        + w.size * w.dtype.itemsize
        + M * N * jnp.dtype(out_dtype).itemsize
    )

    return pl.pallas_call(
        _embed_kernel,
        out_shape=jax.ShapeDtypeStruct((M, N), out_dtype),
        grid_spec=pltpu.PrefetchScalarGridSpec(
            num_scalar_prefetch=0,
            # Ragged trailing block is fine: stale rows in the padded x read
            # only produce stale output rows, which the masked final store
            # never writes -> no host-side pad / slice copies of x or out.
            grid=(pl.cdiv(M, tm),),
            in_specs=[
                pl.BlockSpec((tm, K), lambda i: (i, 0)),
                w_spec,
            ],
            out_specs=pl.BlockSpec((tm, N), lambda i: (i, 0)),
        ),
        compiler_params=pltpu.CompilerParams(
            dimension_semantics=("parallel",),
            vmem_limit_bytes=vmem_limit,
        ),
        cost_estimate=pl.CostEstimate(
            flops=flops, transcendentals=0, bytes_accessed=bytes_accessed
        ),
    )(x2d, w)


# ---------- Path B: general tiled matmul (only if the weight is huge) --------

def _tiled_matmul_kernel(x_ref, w_ref, o_ref, acc_ref):
    @pl.when(pl.program_id(2) == 0)
    def _():
        acc_ref[...] = jnp.zeros_like(acc_ref)

    acc_ref[...] += jnp.dot(
        x_ref[...], w_ref[...], preferred_element_type=jnp.float32
    )

    @pl.when(pl.program_id(2) == pl.num_programs(2) - 1)
    def _():
        o_ref[...] = acc_ref[...].astype(o_ref.dtype)


@functools.partial(
    jax.jit, static_argnames=("tm", "tn", "tk", "out_dtype", "vmem_limit")
)
def _tiled_matmul(x2d, w, *, tm, tn, tk, out_dtype, vmem_limit):
    M, K = x2d.shape
    K2, N = w.shape
    assert K == K2 and M % tm == 0 and N % tn == 0 and K % tk == 0

    flops = 2 * M * K * N
    # Account for HBM re-streaming: with k innermost, x is re-read once per
    # N tile and the weight once per M tile.
    bytes_accessed = (
        x2d.size * x2d.dtype.itemsize * (N // tn)
        + w.size * w.dtype.itemsize * (M // tm)
        + M * N * jnp.dtype(out_dtype).itemsize
    )

    return pl.pallas_call(
        _tiled_matmul_kernel,
        out_shape=jax.ShapeDtypeStruct((M, N), out_dtype),
        grid_spec=pltpu.PrefetchScalarGridSpec(
            num_scalar_prefetch=0,
            grid=(M // tm, N // tn, K // tk),
            in_specs=[
                pl.BlockSpec((tm, tk), lambda i, j, k: (i, k)),
                pl.BlockSpec((tk, tn), lambda i, j, k: (k, j)),
            ],
            out_specs=pl.BlockSpec((tm, tn), lambda i, j, k: (i, j)),
            scratch_shapes=[pltpu.VMEM((tm, tn), jnp.float32)],
        ),
        compiler_params=pltpu.CompilerParams(
            dimension_semantics=("parallel", "parallel", "arbitrary"),
            vmem_limit_bytes=vmem_limit,
        ),
        cost_estimate=pl.CostEstimate(
            flops=flops, transcendentals=0, bytes_accessed=bytes_accessed
        ),
    )(x2d, w)


# ---------- Module wrapper ----------------------------------------------------

class InputEmbedding:
    """JAX/Pallas port of the PyTorch InputEmbedding module.

    forward(x) = x @ self.linear, mapping [..., input_shape[1]] -> [..., d_model].
    """

    def __init__(self, d_model, input_shape, key, weight_dtype=jnp.float32):
        self.d_model = d_model
        self.input_shape = input_shape
        # torch.randn([input_shape[1], d_model]).  float32 by default to match
        # torch.matmul exactly; pass weight_dtype=jnp.bfloat16 to halve HBM
        # traffic in this bandwidth-bound kernel when the caller tolerates
        # reduced precision (the MXU still accumulates in f32).
        self.linear = jax.random.normal(
            key, (input_shape[1], d_model), dtype=jnp.float32
        ).astype(weight_dtype)
        self._cfg = _tpu_generation_config()
        self._single_buffer_ok = None  # lazily probed pl.Buffered(1) support

    # -- Path A tile sizing ----------------------------------------------------

    def _choose_tm(self, M, K, N, x_isz, o_isz, w_bytes):
        budget, num_tc = self._cfg["budget"], self._cfg["num_tc"]
        per_row = K * x_isz + N * o_isz
        # Byte-targeted tile: large enough that the ~0.35us/step grid overhead
        # is noise relative to the tile DMA time.
        tm = max(_SUBLANE,
                 _round_up(_TILE_BYTE_TARGET // max(per_row, 1), _SUBLANE))
        tm = min(tm, _round_up(M, _SUBLANE))
        # Fit double-buffered x/out tiles + the resident weight in the budget.
        while tm > _SUBLANE and (2 * tm * per_row + w_bytes) > budget:
            tm = max(_SUBLANE, _round_up(tm // 2, _SUBLANE))
        # Megacore chips (v7x / v4 / v5p): keep >= 2 grid steps per TensorCore
        # so each core's x/out pipeline stays double-buffered -- but only when
        # M is large enough that the split doesn't shrink tiles into
        # per-step-overhead territory.  Single-TC chips keep the biggest tile.
        if num_tc >= 2:
            min_steps = 2 * num_tc
            if (pl.cdiv(M, tm) < min_steps
                    and M * per_row >= min_steps * (_TILE_BYTE_TARGET // 4)):
                tm = max(_SUBLANE, _round_up(pl.cdiv(M, min_steps), _SUBLANE))
        return tm

    # -- Path A ------------------------------------------------------------------

    def _run_path_a(self, x2d, tm, out_dtype, vmem_limit):
        if self._single_buffer_ok is not False:
            try:
                out2d = _embed_matmul(
                    x2d, self.linear, tm=tm, out_dtype=out_dtype,
                    vmem_limit=vmem_limit, single_buffer_weight=True)
                self._single_buffer_ok = True
                return out2d
            except Exception:
                if self._single_buffer_ok is True:
                    raise  # Buffered(1) worked before; this is a real failure.
                self._single_buffer_ok = False  # fall back to default buffering
        return _embed_matmul(
            x2d, self.linear, tm=tm, out_dtype=out_dtype,
            vmem_limit=vmem_limit, single_buffer_weight=False)

    # -- Path B ------------------------------------------------------------------

    def _run_path_b(self, x2d, out_dtype, x_isz, w_isz, o_isz):
        # Rare fallback: the weight is too large to keep resident in VMEM.
        M, K = x2d.shape
        N = self.d_model
        budget, cap = self._cfg["budget"], self._cfg["cap"]

        # Reset tm -- never inherit a Path-A-shrunk value.  Tall M tiles keep
        # the MXU busy and minimize how often the weight is re-streamed.
        tm = 512 if M >= 512 else _round_up(M, _SUBLANE)
        K_pad = _round_up(K, _LANE)
        N_pad = _round_up(N, _LANE)

        def fits(tm_, tk_, tn_):
            return (2 * tm_ * tk_ * x_isz + 2 * tk_ * tn_ * w_isz
                    + 2 * tm_ * tn_ * o_isz + tm_ * tn_ * 4) <= budget

        while tm > _SUBLANE and not fits(tm, _LANE, _LANE):
            tm = max(_SUBLANE, _round_up(tm // 2, _SUBLANE))

        # Tiles are divisors of the 128-rounded dims (zero-pad waste < 128).
        # Grow tn as far as the budget allows (ideally tn == N_pad, so the
        # weight streams from HBM only once per M tile), then grow tk.
        tn = _LANE
        for cand in _divisor_tiles(N_pad, _LANE):
            if fits(tm, _LANE, cand):
                tn = cand
        tk = _LANE
        for cand in _divisor_tiles(K_pad, _LANE):
            if fits(tm, cand, tn):
                tk = cand

        M_pad = _round_up(M, tm)
        x_p = x2d
        if (M_pad, K_pad) != (M, K):
            x_p = jnp.pad(x2d, ((0, M_pad - M), (0, K_pad - K)))
        w_p = self.linear
        if (K_pad, N_pad) != (K, N):
            w_p = jnp.pad(self.linear, ((0, K_pad - K), (0, N_pad - N)))

        usage = (2 * tm * tk * x_isz + 2 * tk * tn * w_isz
                 + 2 * tm * tn * o_isz + tm * tn * 4)
        vmem_limit = int(min(cap, max(16 * _MIB, usage + 4 * _MIB)))
        out2d = _tiled_matmul(
            x_p, w_p, tm=tm, tn=tn, tk=tk, out_dtype=out_dtype,
            vmem_limit=vmem_limit)
        return out2d[:M, :N]

    # -- forward -----------------------------------------------------------------

    def __call__(self, x):
        K = x.shape[-1]
        assert K == self.linear.shape[0], "last dim of x must equal input_shape[1]"
        lead = x.shape[:-1]
        x2d = x.reshape((-1, K))
        M = x2d.shape[0]
        N = self.d_model

        out_dtype = jnp.result_type(x2d.dtype, self.linear.dtype)
        x_isz = jnp.dtype(x2d.dtype).itemsize
        w_isz = jnp.dtype(self.linear.dtype).itemsize
        o_isz = jnp.dtype(out_dtype).itemsize
        w_bytes = K * N * w_isz
        budget, cap = self._cfg["budget"], self._cfg["cap"]

        # Path A is viable iff one weight buffer + a minimal double-buffered
        # x/out tile fits the per-generation VMEM budget.
        min_tile_bytes = 2 * _SUBLANE * (K * x_isz + N * o_isz)
        if w_bytes + min_tile_bytes <= budget:
            tm = self._choose_tm(M, K, N, x_isz, o_isz, w_bytes)
            # Leave room for a second weight buffer in case pl.Buffered(1) is
            # unavailable and the default double-buffering kicks in.
            vmem_limit = int(min(cap, max(
                16 * _MIB,
                2 * tm * (K * x_isz + N * o_isz) + 2 * w_bytes + 2 * _MIB)))
            out2d = self._run_path_a(x2d, tm, out_dtype, vmem_limit)
        else:
            out2d = self._run_path_b(x2d, out_dtype, x_isz, w_isz, o_isz)

        return out2d.reshape(lead + (N,))


if __name__ == "__main__":
    key = jax.random.PRNGKey(0)
    k_w, k_x = jax.random.split(key)

    batch, seq, in_dim, d_model = 2, 8, 32, 128
    input_shape = (seq, in_dim)  # module only uses input_shape[1] == K

    module = InputEmbedding(d_model, input_shape, k_w)
    x = jax.random.normal(k_x, (batch, seq, in_dim), dtype=jnp.float32)

    out = module(x)
    out = jax.block_until_ready(out)

    # Correctness check against plain JAX matmul (same semantics as torch.matmul).
    ref = jnp.matmul(x, module.linear)
    assert out.shape == (batch, seq, d_model)
    assert out.dtype == ref.dtype
    assert jnp.allclose(out, ref, atol=1e-4, rtol=1e-4)

    print("KERNEL_OK")
</pallas_src>

<mosaic_0001>
module attributes {stable_mosaic.version = 11 : i64} {
  func.func @_embed_kernel(%arg0: i32, %arg1: memref<16x32xf32, #tpu.memory_space<vmem>>, %arg2: memref<32x128xf32, #tpu.memory_space<vmem>>, %arg3: memref<16x128xf32, #tpu.memory_space<vmem>>) attributes {dimension_semantics = [#tpu.dimension_semantics<parallel>], iteration_bounds = array<i64: 1>, scalar_prefetch = 0 : i64, scratch_operands = 0 : i64, tpu.core_type = #tpu.core_type<tc>, window_params = [{transform_indices = @transform_0, window_bounds = array<i64: 16, 32>}, {pipeline_mode = #tpu.pipeline_mode<synchronous>, transform_indices = @transform_1, window_bounds = array<i64: 32, 128>}, {transform_indices = @transform_2, window_bounds = array<i64: 16, 128>}]} {
    %c0 = arith.constant 0 : index
    %c0_0 = arith.constant 0 : index
    %0 = vector.load %arg1[%c0, %c0_0] : memref<16x32xf32, #tpu.memory_space<vmem>>, vector<16x32xf32>
    %c0_1 = arith.constant 0 : index
    %c0_2 = arith.constant 0 : index
    %1 = vector.load %arg2[%c0_1, %c0_2] : memref<32x128xf32, #tpu.memory_space<vmem>>, vector<32x128xf32>
    %cst = arith.constant dense<0.000000e+00> : vector<16x128xf32>
    %2 = tpu.matmul %0, %1, %cst {dimension_numbers = #tpu.dot_dimension_numbers<[1], [0], [0], [1], [0, 0, 1, 1], [], []>} : vector<16x32xf32>, vector<32x128xf32>, vector<16x128xf32> -> vector<16x128xf32>
    %c0_3 = arith.constant 0 : index
    %c0_4 = arith.constant 0 : index
    %3 = vector.load %arg3[%c0_3, %c0_4] : memref<16x128xf32, #tpu.memory_space<vmem>>, vector<16x128xf32>
    tpu.vector_store %arg3[%c0_3, %c0_4], %2 {strides = array<i32>} : memref<16x128xf32, #tpu.memory_space<vmem>>, vector<16x128xf32>,
    return
  }
  func.func @transform_0(%arg0: i32) -> (i32, i32) {
    %c0_i32 = arith.constant 0 : i32
    %c0_i32_0 = arith.constant 0 : i32
    return %arg0, %c0_i32 : i32, i32
  }
  func.func @transform_1(%arg0: i32) -> (i32, i32) {
    %c0_i32 = arith.constant 0 : i32
    %c0_i32_0 = arith.constant 0 : i32
    %c0_i32_1 = arith.constant 0 : i32
    return %c0_i32, %c0_i32_0 : i32, i32
  }
  func.func @transform_2(%arg0: i32) -> (i32, i32) {
    %c0_i32 = arith.constant 0 : i32
    %c0_i32_0 = arith.constant 0 : i32
    return %arg0, %c0_i32 : i32, i32
  }
}

module attributes {stable_mosaic.version = 11 : i64} {
  func.func @_embed_kernel(%arg0: i32, %arg1: memref<16x32xf32, #tpu.memory_space<vmem>>, %arg2: memref<32x128xf32, #tpu.memory_space<vmem>>, %arg3: memref<16x128xf32, #tpu.memory_space<vmem>>) attributes {dimension_semantics = [#tpu.dimension_semantics<parallel>], iteration_bounds = array<i64: 1>, scalar_prefetch = 0 : i64, scratch_operands = 0 : i64, tpu.core_type = #tpu.core_type<tc>, window_params = [{transform_indices = @transform_0, window_bounds = array<i64: 16, 32>}, {pipeline_mode = #tpu.pipeline_mode<synchronous>, transform_indices = @transform_1, window_bounds = array<i64: 32, 128>}, {transform_indices = @transform_2, window_bounds = array<i64: 16, 128>}]} {
    %c0 = arith.constant 0 : index
    %c0_0 = arith.constant 0 : index
    %0 = vector.load %arg1[%c0, %c0_0] : memref<16x32xf32, #tpu.memory_space<vmem>>, vector<16x32xf32>
    %c0_1 = arith.constant 0 : index
    %c0_2 = arith.constant 0 : index
    %1 = vector.load %arg2[%c0_1, %c0_2] : memref<32x128xf32, #tpu.memory_space<vmem>>, vector<32x128xf32>
    %cst = arith.constant dense<0.000000e+00> : vector<16x128xf32>
    %2 = tpu.matmul %0, %1, %cst {dimension_numbers = #tpu.dot_dimension_numbers<[1], [0], [0], [1], [0, 0, 1, 1], [], []>} : vector<16x32xf32>, vector<32x128xf32>, vector<16x128xf32> -> vector<16x128xf32>
    %c0_3 = arith.constant 0 : index
    %c0_4 = arith.constant 0 : index
    %3 = vector.load %arg3[%c0_3, %c0_4] : memref<16x128xf32, #tpu.memory_space<vmem>>, vector<16x128xf32>
    tpu.vector_store %arg3[%c0_3, %c0_4], %2 {strides = array<i32>} : memref<16x128xf32, #tpu.memory_space<vmem>>, vector<16x128xf32>,
    return
  }
  func.func @transform_0(%arg0: i32) -> (i32, i32) {
    %c0_i32 = arith.constant 0 : i32
    %c0_i32_0 = arith.constant 0 : i32
    return %arg0, %c0_i32 : i32, i32
  }
  func.func @transform_1(%arg0: i32) -> (i32, i32) {
    %c0_i32 = arith.constant 0 : i32
    %c0_i32_0 = arith.constant 0 : i32
    %c0_i32_1 = arith.constant 0 : i32
    return %c0_i32, %c0_i32_0 : i32, i32
  }
  func.func @transform_2(%arg0: i32) -> (i32, i32) {
    %c0_i32 = arith.constant 0 : i32
    %c0_i32_0 = arith.constant 0 : i32
    return %arg0, %c0_i32 : i32, i32
  }
}

</mosaic_0001>

<llo_original>
// kernel: _embed_matmul.1
$region0: #{_embed_matmul.1}
  #allocation0 [shape = 'u32[]', space=smem, size = 0x4, offset = 0x4, fixed_abs, tag = 'smem constant byte address 0x4 - core index']
  #allocation1 [shape = 'u32[72,128]{1,0:T(1,128)}', space=vmem, size = 0x9000, scoped, tag = 'internal scratch']
  %s0 = inlined_call_operand.hbm [shape: f32[16,32], index: 0, kind: input, shape index: {}]
  %s1 = inlined_call_operand.hbm [shape: f32[32,128], index: 1, kind: input, shape index: {}]
  %s2 = inlined_call_operand.hbm [shape: f32[16,128], index: 2, kind: output, shape index: {}]
  %s3 = sld [smem:[#allocation0]]
  $region26: #{_embed_matmul.1} parent=0
    _
  %s5 = ssub.s32 1, %s3
  %s6 = scalar_select 0, %s5, %s3
  $region1: #{_embed_matmul.1} parent=0
    #allocation2 [shape = 'u8[8192]{0}', space=vmem, size = 0x2000, scoped, tag = 'input window, operand 0, single buffered']
    #allocation3 [shape = 's32[1]{0}', space=sflag, size = 0x4, scoped, tag = 'scoped memory for _embed_matmul.1']
    #allocation4 [shape = 's32[1]{0}', space=sflag, size = 0x4, scoped, tag = 'scoped memory for _embed_matmul.1']
    #allocation5 [shape = 'u8[16384]{0}', space=vmem, size = 0x4000, scoped, tag = 'input window, operand 1, single buffered']
    #allocation6 [shape = 's32[1]{0}', space=sflag, size = 0x4, scoped, tag = 'scoped memory for _embed_matmul.1']
    #allocation7 [shape = 'u8[8192]{0}', space=vmem, size = 0x2000, scoped, tag = 'output window, operand 0, single buffered']
    %7 = vsyncpa [#allocation3], 0
    %8 = vsyncpa [#allocation6], 0
    %9 = vsyncpa [#allocation4], 0
    // Predicated region
    $region2: #{_embed_matmul.1} parent=1 // pred_check
      _
    $region3: #{_embed_matmul.1} parent=1 // pred_check_branch
      %11 = sbr.rel (0) target = $region5
    $region4: #{_embed_matmul.1} parent=1 // pred_region
      %13 = vsyncadd [#allocation3], 0
      %s14 = sshll.u32 %s0, 4
      %s15 = int_to_ptr.hbm [resolvable:$true] %s14
      %s16 = sshll.u32 [#allocation2], 4
      %s17 = int_to_ptr.vmem [resolvable:$true] %s16
      %22 = dma.hbm_to_vmem [thread:$0]  %s15, 256, %s17, [#allocation3], 128, 128, 8
    $region5: #{_embed_matmul.1} parent=1 // pred_fallthru
      _
    // Predicated region
    $region6: #{_embed_matmul.1} parent=1 // pred_check
      _
    $region7: #{_embed_matmul.1} parent=1 // pred_check_branch
      %24 = sbr.rel (0) target = $region9
    $region8: #{_embed_matmul.1} parent=1 // pred_region
      %26 = vsyncadd [#allocation6], 0
      %s27 = sshll.u32 %s1, 4
      %s28 = int_to_ptr.hbm [resolvable:$true] %s27
      %s29 = sshll.u32 [#allocation5], 4
      %s30 = int_to_ptr.vmem [resolvable:$true] %s29
      %35 = dma.hbm_to_vmem [thread:$0]  %s28, 512, %s30, [#allocation6], 128, 128, 8
    $region9: #{_embed_matmul.1} parent=1 // pred_fallthru
      _
    // Predicated region
    $region10: #{_embed_matmul.1} parent=1 // pred_check
      _
    $region11: #{_embed_matmul.1} parent=1 // pred_check_branch
      %37 = sbr.rel (0) target = $region13
    $region12: #{_embed_matmul.1} parent=1 // pred_region
      %39 = dma.done [#allocation3], 256
    $region13: #{_embed_matmul.1} parent=1 // pred_fallthru
      _
    // Predicated region
    $region14: #{_embed_matmul.1} parent=1 // pred_check
      _
    $region15: #{_embed_matmul.1} parent=1 // pred_check_branch
      %41 = sbr.rel (0) target = $region17
    $region16: #{_embed_matmul.1} parent=1 // pred_region
      %43 = dma.done [#allocation6], 512
    $region17: #{_embed_matmul.1} parent=1 // pred_fallthru
      _
    %v44 = vld [vmem:[#allocation2] sm:$0xff]
    %v45 = vld [vmem:[#allocation2 + $0x8] sm:$0xff]
    %v46 = vld [vmem:[#allocation5] sm:$0xff]
    %v47 = vld [vmem:[#allocation5 + $0x8] sm:$0xff]
    %v48 = vld [vmem:[#allocation5 + $0x10] sm:$0xff]
    %v49 = vld [vmem:[#allocation5 + $0x18] sm:$0xff]
    %vm50 = vcmask 261120
    %v52 = vsel %vm50, %v44, 0
    %v55 = vsel %vm50, %v45, 0
    %57 = vmatpush.msra.mxu0 0.0
    %58 = vmatpush.msra.mxu0 0.0
    %59 = vmatpush.msra.mxu0 0.0
    %60 = vmatpush.msra.mxu0 0.0
    %61 = vmatpush.msra.mxu0 0.0
    %62 = vmatpush.msra.mxu0 0.0
    %63 = vmatpush.msra.mxu0 0.0
    %64 = vmatpush.msra.mxu0 0.0
    %65 = vmatpush.msra.mxu0 0.0
    %66 = vmatpush.msra.mxu0 0.0
    %67 = vmatpush.msra.mxu0 0.0
    %68 = vmatpush.msra.mxu0 0.0
    %69 = vmatpush.msra.mxu0 %v49
    %70 = vmatpush.msra.mxu0 %v48
    %71 = vmatpush.msra.mxu0 %v47
    %72 = vmatpush.msra.mxu0 %v46
    %73 = vmatmul.f32.gmra.mxu0 %v52
    %v74 = vpop.f32.mrf.mxu0
    %v75 = vadd.f32 0.0, %v74
    %76 = vmatmul.f32.gmra.mxu0 %v55
    %v77 = vpop.f32.mrf.mxu0
    %v78 = vadd.f32 0.0, %v77
    %79 = vdwg.mxu0
    %80 = vst [vmem:[#allocation7] sm:$0xff] %v75
    %81 = vst [vmem:[#allocation7 + $0x8] sm:$0xff] %v78
    // Predicated region
    $region18: #{_embed_matmul.1} parent=1 // pred_check
      _
    $region19: #{_embed_matmul.1} parent=1 // pred_check_branch
      %83 = sbr.rel (0) target = $region21
    $region20: #{_embed_matmul.1} parent=1 // pred_region
      %85 = vsyncadd [#allocation4], 0
      %s86 = sshll.u32 [#allocation7], 4
      %s87 = int_to_ptr.vmem [resolvable:$true] %s86
      %s88 = sshll.u32 %s2, 4
      %s89 = int_to_ptr.hbm [resolvable:$true] %s88
      %94 = dma.vmem_to_hbm [thread:$0]  %s87, 256, %s89, [#allocation4], 128, 128, 8
    $region21: #{_embed_matmul.1} parent=1 // pred_fallthru
      _
    // Predicated region
    $region22: #{_embed_matmul.1} parent=1 // pred_check
      _
    $region23: #{_embed_matmul.1} parent=1 // pred_check_branch
      %96 = sbr.rel (0) target = $region25
    $region24: #{_embed_matmul.1} parent=1 // pred_region
      %98 = dma.done [#allocation4], 256
    $region25: #{_embed_matmul.1} parent=1 // pred_fallthru
      _
    %99 = vsyncpa [#allocation3], 1
    %100 = vsyncpa [#allocation6], 1
    %101 = vsyncpa [#allocation4], 1

// kernel: _embed_matmul.1
$region0: #{_embed_matmul.1}
  #allocation0 [shape = 'u32[]', space=smem, size = 0x4, offset = 0x4, fixed_abs, tag = 'smem constant byte address 0x4 - core index']
  #allocation1 [shape = 'u32[72,128]{1,0:T(1,128)}', space=vmem, size = 0x9000, scoped, tag = 'internal scratch']
  %s0 = inlined_call_operand.hbm [shape: f32[16,32], index: 0, kind: input, shape index: {}]
  %s1 = inlined_call_operand.hbm [shape: f32[32,128], index: 1, kind: input, shape index: {}]
  %s2 = inlined_call_operand.hbm [shape: f32[16,128], index: 2, kind: output, shape index: {}]
  %s3 = sld [smem:[#allocation0]]
  $region26: #{_embed_matmul.1} parent=0
    _
  %s5 = ssub.s32 1, %s3
  %s6 = scalar_select 0, %s5, %s3
  $region1: #{_embed_matmul.1} parent=0
    #allocation2 [shape = 'u8[8192]{0}', space=vmem, size = 0x2000, scoped, tag = 'input window, operand 0, single buffered']
    #allocation3 [shape = 's32[1]{0}', space=sflag, size = 0x4, scoped, tag = 'scoped memory for _embed_matmul.1']
    #allocation4 [shape = 's32[1]{0}', space=sflag, size = 0x4, scoped, tag = 'scoped memory for _embed_matmul.1']
    #allocation5 [shape = 'u8[16384]{0}', space=vmem, size = 0x4000, scoped, tag = 'input window, operand 1, single buffered']
    #allocation6 [shape = 's32[1]{0}', space=sflag, size = 0x4, scoped, tag = 'scoped memory for _embed_matmul.1']
    #allocation7 [shape = 'u8[8192]{0}', space=vmem, size = 0x2000, scoped, tag = 'output window, operand 0, single buffered']
    %7 = vsyncpa [#allocation3], 0
    %8 = vsyncpa [#allocation6], 0
    %9 = vsyncpa [#allocation4], 0
    // Predicated region
    $region2: #{_embed_matmul.1} parent=1 // pred_check
      _
    $region3: #{_embed_matmul.1} parent=1 // pred_check_branch
      %11 = sbr.rel (0) target = $region5
    $region4: #{_embed_matmul.1} parent=1 // pred_region
      %13 = vsyncadd [#allocation3], 0
      %s14 = sshll.u32 %s0, 4
      %s15 = int_to_ptr.hbm [resolvable:$true] %s14
      %s16 = sshll.u32 [#allocation2], 4
      %s17 = int_to_ptr.vmem [resolvable:$true] %s16
      %22 = dma.hbm_to_vmem [thread:$0]  %s15, 256, %s17, [#allocation3], 128, 128, 8
    $region5: #{_embed_matmul.1} parent=1 // pred_fallthru
      _
    // Predicated region
    $region6: #{_embed_matmul.1} parent=1 // pred_check
      _
    $region7: #{_embed_matmul.1} parent=1 // pred_check_branch
      %24 = sbr.rel (0) target = $region9
    $region8: #{_embed_matmul.1} parent=1 // pred_region
      %26 = vsyncadd [#allocation6], 0
      %s27 = sshll.u32 %s1, 4
      %s28 = int_to_ptr.hbm [resolvable:$true] %s27
      %s29 = sshll.u32 [#allocation5], 4
      %s30 = int_to_ptr.vmem [resolvable:$true] %s29
      %35 = dma.hbm_to_vmem [thread:$0]  %s28, 512, %s30, [#allocation6], 128, 128, 8
    $region9: #{_embed_matmul.1} parent=1 // pred_fallthru
      _
    // Predicated region
    $region10: #{_embed_matmul.1} parent=1 // pred_check
      _
    $region11: #{_embed_matmul.1} parent=1 // pred_check_branch
      %37 = sbr.rel (0) target = $region13
    $region12: #{_embed_matmul.1} parent=1 // pred_region
      %39 = dma.done [#allocation3], 256
    $region13: #{_embed_matmul.1} parent=1 // pred_fallthru
      _
    // Predicated region
    $region14: #{_embed_matmul.1} parent=1 // pred_check
      _
    $region15: #{_embed_matmul.1} parent=1 // pred_check_branch
      %41 = sbr.rel (0) target = $region17
    $region16: #{_embed_matmul.1} parent=1 // pred_region
      %43 = dma.done [#allocation6], 512
    $region17: #{_embed_matmul.1} parent=1 // pred_fallthru
      _
    %v44 = vld [vmem:[#allocation2] sm:$0xff]
    %v45 = vld [vmem:[#allocation2 + $0x8] sm:$0xff]
    %v46 = vld [vmem:[#allocation5] sm:$0xff]
    %v47 = vld [vmem:[#allocation5 + $0x8] sm:$0xff]
    %v48 = vld [vmem:[#allocation5 + $0x10] sm:$0xff]
    %v49 = vld [vmem:[#allocation5 + $0x18] sm:$0xff]
    %vm50 = vcmask 261120
    %v52 = vsel %vm50, %v44, 0
    %v55 = vsel %vm50, %v45, 0
    %57 = vmatpush.msra.mxu0 0.0
    %58 = vmatpush.msra.mxu0 0.0
    %59 = vmatpush.msra.mxu0 0.0
    %60 = vmatpush.msra.mxu0 0.0
    %61 = vmatpush.msra.mxu0 0.0
    %62 = vmatpush.msra.mxu0 0.0
    %63 = vmatpush.msra.mxu0 0.0
    %64 = vmatpush.msra.mxu0 0.0
    %65 = vmatpush.msra.mxu0 0.0
    %66 = vmatpush.msra.mxu0 0.0
    %67 = vmatpush.msra.mxu0 0.0
    %68 = vmatpush.msra.mxu0 0.0
    %69 = vmatpush.msra.mxu0 %v49
    %70 = vmatpush.msra.mxu0 %v48
    %71 = vmatpush.msra.mxu0 %v47
    %72 = vmatpush.msra.mxu0 %v46
    %73 = vmatmul.f32.gmra.mxu0 %v52
    %v74 = vpop.f32.mrf.mxu0
    %v75 = vadd.f32 0.0, %v74
    %76 = vmatmul.f32.gmra.mxu0 %v55
    %v77 = vpop.f32.mrf.mxu0
    %v78 = vadd.f32 0.0, %v77
    %79 = vdwg.mxu0
    %80 = vst [vmem:[#allocation7] sm:$0xff] %v75
    %81 = vst [vmem:[#allocation7 + $0x8] sm:$0xff] %v78
    // Predicated region
    $region18: #{_embed_matmul.1} parent=1 // pred_check
      _
    $region19: #{_embed_matmul.1} parent=1 // pred_check_branch
      %83 = sbr.rel (0) target = $region21
    $region20: #{_embed_matmul.1} parent=1 // pred_region
      %85 = vsyncadd [#allocation4], 0
      %s86 = sshll.u32 [#allocation7], 4
      %s87 = int_to_ptr.vmem [resolvable:$true] %s86
      %s88 = sshll.u32 %s2, 4
      %s89 = int_to_ptr.hbm [resolvable:$true] %s88
      %94 = dma.vmem_to_hbm [thread:$0]  %s87, 256, %s89, [#allocation4], 128, 128, 8
    $region21: #{_embed_matmul.1} parent=1 // pred_fallthru
      _
    // Predicated region
    $region22: #{_embed_matmul.1} parent=1 // pred_check
      _
    $region23: #{_embed_matmul.1} parent=1 // pred_check_branch
      %96 = sbr.rel (0) target = $region25
    $region24: #{_embed_matmul.1} parent=1 // pred_region
      %98 = dma.done [#allocation4], 256
    $region25: #{_embed_matmul.1} parent=1 // pred_fallthru
      _
    %99 = vsyncpa [#allocation3], 1
    %100 = vsyncpa [#allocation6], 1
    %101 = vsyncpa [#allocation4], 1

</llo_original>
